<compile_context>
chip_gen: v7x
topology: tpu7x:2x2x1
jax: 0.10.0
libtpu: 0.0.40
codegen_flags: <defaults>
</compile_context>

<pallas_src>
import functools
from math import sqrt

import jax
import jax.numpy as jnp
from jax.experimental import pallas as pl
from jax.experimental.pallas import tpu as pltpu


def _dot_attention_kernel(q_ref, k_ref, v_ref, ctx_ref, attn_ref, *,
                          scale, use_bf16_mxu):
    # One grid step = (one batch element) x (one tile of Lq rows).
    q = q_ref[0]                                  # (TQ, D)
    if scale is not None:
        # Fold the scale into q (TQ*D muls, not TQ*Lk). f32 inputs are scaled
        # before the bf16 cast; bf16 inputs are not round-tripped through f32.
        q = q * jnp.asarray(scale, dtype=q.dtype)
    k = k_ref[0]                                  # (Lk, D)
    v = v_ref[0]                                  # (Lk, Dv)

    mxu_dtype = jnp.bfloat16 if use_bf16_mxu else q.dtype
    q_m = q.astype(mxu_dtype)                     # no-op if already bf16
    k_m = k.astype(mxu_dtype)

    # attention scores = q @ k^T, contracting K's last dim directly (no k.T /
    # XLU transpose); bf16 MXU operands, f32 accumulation.
    s = jax.lax.dot_general(
        q_m, k_m,
        dimension_numbers=(((1,), (1,)), ((), ())),
        preferred_element_type=jnp.float32,
    )                                             # (TQ, Lk) f32

    # TODO(synk): attn_mask (masked_fill with -inf) not wired up; the module
    # default attn_mask=None is the path implemented here.

    # Numerically-stable softmax over the last axis (torch Softmax(dim=2)).
    m = jnp.max(s, axis=-1, keepdims=True)
    e = jnp.exp(s - m)
    denom = jnp.sum(e, axis=-1, keepdims=True)
    # Exact divide: only TQ reciprocals per tile, so approx buys nothing and
    # exact keeps the returned attention rows summing to 1.
    p = e / denom                                 # (TQ, Lk) f32

    # TODO(synk): attention_dropout > 0 would need pltpu.prng_* here; the
    # module default (0.0) is identity, which is what we implement.

    # Single cast of p for the MXU, reused for the attention store when the
    # output dtype matches (avoids a redundant TQ*Lk VPU cast pass).
    p_m = p.astype(mxu_dtype)
    if jnp.dtype(attn_ref.dtype) == jnp.dtype(mxu_dtype):
        attn_ref[0] = p_m
    else:
        attn_ref[0] = p.astype(attn_ref.dtype)

    # context = attention @ v -> (TQ, Dv); bf16 MXU operands, f32 accumulate.
    ctx = jnp.dot(p_m, v.astype(mxu_dtype), preferred_element_type=jnp.float32)
    ctx_ref[0] = ctx.astype(ctx_ref.dtype)


def _vmem_limits():
    """Generation-aware (physical-VMEM-derived) scoped limit + tiling budget."""
    phys = 64 * 1024 * 1024                       # conservative default (v7x)
    try:
        info = pltpu.get_tpu_info()
        phys = int(getattr(info, "vmem_capacity_bytes", phys))
    except Exception:
        pass
    # 128 MiB chips (v5e/v6e) -> 96 MiB scoped limit; 64 MiB (v7x) -> 48 MiB.
    limit = min(phys * 3 // 4, 96 * 1024 * 1024)
    # Size tiles against ~2/3 of the limit, minus compiler-scratch headroom,
    # so double-buffering + Mosaic internal scratch never hit the ceiling.
    budget = max(limit * 2 // 3 - 2 * 1024 * 1024, 4 * 1024 * 1024)
    return limit, budget


def _pick_q_tile(Lq, Lk, D, Dv, in_itemsize, attn_itemsize, budget_bytes):
    """Pick TQ (q rows per grid step) whose VMEM working set fits the budget."""

    def working_set(tq):
        # Double-buffered q / ctx / attention tiles.
        tiles = 2 * in_itemsize * tq * (D + Dv) + 2 * attn_itemsize * tq * Lk
        # K/V slabs: counted double-buffered even though Buffered(1) is
        # requested, so the double-buffered fallback path is also safe.
        kv = 2 * in_itemsize * Lk * (D + Dv)
        # f32 intermediates (s, e, p) + bf16 MXU copies of q / k / v / p.
        interm = 3 * 4 * tq * Lk + 2 * (tq * D + Lk * (D + Dv) + tq * Lk)
        return tiles + kv + interm

    if Lq <= 1024 and working_set(Lq) <= budget_bytes:
        return Lq                                  # full extent, one tile
    # Prefer big MXU / HBM-roofline-friendly tiles; 8 = sublane minimum.
    candidates = (1024, 512, 256, 128, 64, 32, 16, 8)
    divisors = [t for t in candidates if t <= Lq and Lq % t == 0]
    for t in divisors:                             # largest divisor that fits
        if working_set(t) <= budget_bytes:
            return t
    # Nothing fits: never fall back to the full Lq extent — take the smallest
    # divisor and let the scoped limit's headroom absorb the rest.
    # TODO(synk): tile Lk (online softmax) when even the smallest TQ overflows.
    return divisors[-1] if divisors else min(Lq, 8)


def dot_attention(q, k, v, scale=None, *, attn_dtype=None, use_bf16_mxu=True):
    """Pallas implementation of the PyTorch dot_attention.forward
    (attn_mask=None, attention_dropout=0.0 path)."""
    B, Lq, D = q.shape
    Bk, Lk, Dk = k.shape
    Bv, Lkv, Dv = v.shape
    assert B == Bk == Bv and D == Dk and Lk == Lkv

    # torch does `if scale:` -> a falsy scale (None / 0) means "no scaling".
    scale = scale if scale else None
    attn_dtype = jnp.dtype(q.dtype) if attn_dtype is None else jnp.dtype(attn_dtype)

    vmem_limit, budget = _vmem_limits()
    TQ = _pick_q_tile(Lq, Lk, D, Dv, jnp.dtype(q.dtype).itemsize,
                      attn_dtype.itemsize, budget)
    n_q_tiles = pl.cdiv(Lq, TQ)

    kernel = functools.partial(_dot_attention_kernel, scale=scale,
                               use_bf16_mxu=use_bf16_mxu)

    out_shapes = (
        jax.ShapeDtypeStruct((B, Lq, Dv), q.dtype),    # context
        jax.ShapeDtypeStruct((B, Lq, Lk), attn_dtype),  # attention
    )

    def build(kv_single_buffered):
        kv_kwargs = (dict(pipeline_mode=pl.Buffered(1))
                     if kv_single_buffered else {})
        grid_spec = pltpu.PrefetchScalarGridSpec(
            num_scalar_prefetch=0,
            grid=(B, n_q_tiles),
            in_specs=[
                pl.BlockSpec((1, TQ, D), lambda b, qi: (b, qi, 0)),   # q tile
                pl.BlockSpec((1, Lk, D), lambda b, qi: (b, 0, 0),     # k slab
                             **kv_kwargs),
                pl.BlockSpec((1, Lk, Dv), lambda b, qi: (b, 0, 0),    # v slab
                             **kv_kwargs),
            ],
            out_specs=[
                pl.BlockSpec((1, TQ, Dv), lambda b, qi: (b, qi, 0)),  # context
                # full-Lk last dim keeps the big writeback lane-dense
                pl.BlockSpec((1, TQ, Lk), lambda b, qi: (b, qi, 0)),  # attention
            ],
        )
        return pl.pallas_call(
            kernel,
            out_shape=out_shapes,
            grid_spec=grid_spec,
            compiler_params=pltpu.CompilerParams(
                # b leading + parallel: megacore (v7x 2 TCs) splits batches so
                # each core keeps its own K/V slabs resident.
                dimension_semantics=("parallel", "parallel"),
                vmem_limit_bytes=vmem_limit,
            ),
        )

    try:
        # K/V block index is constant across qi -> single-buffer them to halve
        # their VMEM footprint (one exposed DMA per batch boundary).
        return build(kv_single_buffered=True)(q, k, v)
    except Exception:
        # Fall back to default double-buffering if Buffered(1) is rejected.
        return build(kv_single_buffered=False)(q, k, v)


def _reference(q, k, v, scale=None):
    s = jnp.einsum("bqd,bkd->bqk", q, k)
    if scale:
        s = s * scale
    p = jax.nn.softmax(s, axis=-1)
    ctx = jnp.einsum("bqk,bkd->bqd", p, v)
    return ctx, p


if __name__ == "__main__":
    key = jax.random.PRNGKey(0)
    kq, kk, kv = jax.random.split(key, 3)

    B, Lq, Lk, D, Dv = 2, 8, 8, 32, 32
    q = jax.random.normal(kq, (B, Lq, D), dtype=jnp.float32)
    k = jax.random.normal(kk, (B, Lk, D), dtype=jnp.float32)
    v = jax.random.normal(kv, (B, Lk, Dv), dtype=jnp.float32)
    scale = 1.0 / sqrt(D)

    ctx, attn = dot_attention(q, k, v, scale=scale)
    jax.block_until_ready((ctx, attn))

    ctx_ref, attn_ref = _reference(q, k, v, scale=scale)
    # bf16 MXU operands (f32 accumulation) -> tolerances sized for bf16 input
    # rounding; the attention itself is stored in f32 here.
    assert jnp.allclose(attn, attn_ref, atol=2e-2, rtol=2e-2), "attention mismatch"
    assert jnp.allclose(ctx, ctx_ref, atol=2e-2, rtol=2e-2), "context mismatch"
    # Exact (non-approx) softmax denominator -> rows sum to 1.
    assert jnp.allclose(jnp.sum(attn, axis=-1), 1.0, atol=1e-5), "rows don't sum to 1"

    print("KERNEL_OK")
</pallas_src>

<mosaic_0001>
module attributes {stable_mosaic.version = 11 : i64} {
  func.func @_dot_attention_kernel(%arg0: i32, %arg1: i32, %arg2: memref<1x8x32xf32, #tpu.memory_space<vmem>>, %arg3: memref<1x8x32xf32, #tpu.memory_space<vmem>>, %arg4: memref<1x8x32xf32, #tpu.memory_space<vmem>>, %arg5: memref<1x8x32xf32, #tpu.memory_space<vmem>>, %arg6: memref<1x8x8xf32, #tpu.memory_space<vmem>>) attributes {dimension_semantics = [#tpu.dimension_semantics<parallel>, #tpu.dimension_semantics<parallel>], iteration_bounds = array<i64: 2, 1>, scalar_prefetch = 0 : i64, scratch_operands = 0 : i64, tpu.core_type = #tpu.core_type<tc>, window_params = [{transform_indices = @transform_0, window_bounds = array<i64: 1, 8, 32>}, {pipeline_mode = #tpu.pipeline_mode<synchronous>, transform_indices = @transform_1, window_bounds = array<i64: 1, 8, 32>}, {pipeline_mode = #tpu.pipeline_mode<synchronous>, transform_indices = @transform_2, window_bounds = array<i64: 1, 8, 32>}, {transform_indices = @transform_3, window_bounds = array<i64: 1, 8, 32>}, {transform_indices = @transform_4, window_bounds = array<i64: 1, 8, 8>}]} {
    %c0 = arith.constant 0 : index
    %c0_0 = arith.constant 0 : index
    %c0_1 = arith.constant 0 : index
    %0 = vector.load %arg2[%c0, %c0_0, %c0_1] : memref<1x8x32xf32, #tpu.memory_space<vmem>>, vector<1x8x32xf32>
    %1 = vector.shape_cast %0 : vector<1x8x32xf32> to vector<8x32xf32>
    %cst = arith.constant 0.176776692 : f32
    %2 = vector.broadcast %cst : f32 to vector<8x32xf32>
    %3 = arith.mulf %1, %2 : vector<8x32xf32>
    %c0_2 = arith.constant 0 : index
    %c0_3 = arith.constant 0 : index
    %c0_4 = arith.constant 0 : index
    %4 = vector.load %arg3[%c0_2, %c0_3, %c0_4] : memref<1x8x32xf32, #tpu.memory_space<vmem>>, vector<1x8x32xf32>
    %5 = vector.shape_cast %4 : vector<1x8x32xf32> to vector<8x32xf32>
    %c0_5 = arith.constant 0 : index
    %c0_6 = arith.constant 0 : index
    %c0_7 = arith.constant 0 : index
    %6 = vector.load %arg4[%c0_5, %c0_6, %c0_7] : memref<1x8x32xf32, #tpu.memory_space<vmem>>, vector<1x8x32xf32>
    %7 = vector.shape_cast %6 : vector<1x8x32xf32> to vector<8x32xf32>
    %8 = arith.truncf %3 : vector<8x32xf32> to vector<8x32xbf16>
    %9 = arith.truncf %5 : vector<8x32xf32> to vector<8x32xbf16>
    %cst_8 = arith.constant dense<0.000000e+00> : vector<8x8xf32>
    %10 = tpu.matmul %8, %9, %cst_8 {dimension_numbers = #tpu.dot_dimension_numbers<[1], [1], [0], [0], [0, 0, 1, 0], [], []>} : vector<8x32xbf16>, vector<8x32xbf16>, vector<8x8xf32> -> vector<8x8xf32>
    %cst_9 = arith.constant dense<0xFF800000> : vector<8xf32>
    %11 = vector.multi_reduction <maximumf>, %10, %cst_9 [1] : vector<8x8xf32> to vector<8xf32>
    %12 = vector.shape_cast %11 : vector<8xf32> to vector<8x1xf32>
    %13 = vector.broadcast %12 : vector<8x1xf32> to vector<8x8xf32>
    %14 = arith.subf %10, %13 : vector<8x8xf32>
    %15 = math.exp %14 : vector<8x8xf32>
    %cst_10 = arith.constant dense<0.000000e+00> : vector<8xf32>
    %16 = vector.multi_reduction <add>, %15, %cst_10 [1] : vector<8x8xf32> to vector<8xf32>
    %17 = vector.shape_cast %16 : vector<8xf32> to vector<8x1xf32>
    %18 = vector.broadcast %17 : vector<8x1xf32> to vector<8x8xf32>
    %19 = arith.divf %15, %18 : vector<8x8xf32>
    %20 = arith.truncf %19 : vector<8x8xf32> to vector<8x8xbf16>
    %c0_11 = arith.constant 0 : index
    %c0_12 = arith.constant 0 : index
    %c0_13 = arith.constant 0 : index
    %21 = vector.load %arg6[%c0_11, %c0_12, %c0_13] : memref<1x8x8xf32, #tpu.memory_space<vmem>>, vector<1x8x8xf32>
    %22 = vector.shape_cast %21 : vector<1x8x8xf32> to vector<8x8xf32>
    %23 = vector.shape_cast %19 : vector<8x8xf32> to vector<1x8x8xf32>
    tpu.vector_store %arg6[%c0_11, %c0_12, %c0_13], %23 {strides = array<i32>} : memref<1x8x8xf32, #tpu.memory_space<vmem>>, vector<1x8x8xf32>,
    %24 = arith.truncf %7 : vector<8x32xf32> to vector<8x32xbf16>
    %cst_14 = arith.constant dense<0.000000e+00> : vector<8x32xf32>
    %25 = tpu.matmul %20, %24, %cst_14 {dimension_numbers = #tpu.dot_dimension_numbers<[1], [0], [0], [1], [0, 0, 1, 1], [], []>} : vector<8x8xbf16>, vector<8x32xbf16>, vector<8x32xf32> -> vector<8x32xf32>
    %c0_15 = arith.constant 0 : index
    %c0_16 = arith.constant 0 : index
    %c0_17 = arith.constant 0 : index
    %26 = vector.load %arg5[%c0_15, %c0_16, %c0_17] : memref<1x8x32xf32, #tpu.memory_space<vmem>>, vector<1x8x32xf32>
    %27 = vector.shape_cast %26 : vector<1x8x32xf32> to vector<8x32xf32>
    %28 = vector.shape_cast %25 : vector<8x32xf32> to vector<1x8x32xf32>
    tpu.vector_store %arg5[%c0_15, %c0_16, %c0_17], %28 {strides = array<i32>} : memref<1x8x32xf32, #tpu.memory_space<vmem>>, vector<1x8x32xf32>,
    return
  }
  func.func @transform_0(%arg0: i32, %arg1: i32) -> (i32, i32, i32) {
    %c0_i32 = arith.constant 0 : i32
    %c0_i32_0 = arith.constant 0 : i32
    return %arg0, %arg1, %c0_i32 : i32, i32, i32
  }
  func.func @transform_1(%arg0: i32, %arg1: i32) -> (i32, i32, i32) {
    %c0_i32 = arith.constant 0 : i32
    %c0_i32_0 = arith.constant 0 : i32
    %c0_i32_1 = arith.constant 0 : i32
    return %arg0, %c0_i32, %c0_i32_0 : i32, i32, i32
  }
  func.func @transform_2(%arg0: i32, %arg1: i32) -> (i32, i32, i32) {
    %c0_i32 = arith.constant 0 : i32
    %c0_i32_0 = arith.constant 0 : i32
    %c0_i32_1 = arith.constant 0 : i32
    return %arg0, %c0_i32, %c0_i32_0 : i32, i32, i32
  }
  func.func @transform_3(%arg0: i32, %arg1: i32) -> (i32, i32, i32) {
    %c0_i32 = arith.constant 0 : i32
    %c0_i32_0 = arith.constant 0 : i32
    return %arg0, %arg1, %c0_i32 : i32, i32, i32
  }
  func.func @transform_4(%arg0: i32, %arg1: i32) -> (i32, i32, i32) {
    %c0_i32 = arith.constant 0 : i32
    %c0_i32_0 = arith.constant 0 : i32
    return %arg0, %arg1, %c0_i32 : i32, i32, i32
  }
}

module attributes {stable_mosaic.version = 11 : i64} {
  func.func @_dot_attention_kernel(%arg0: i32, %arg1: i32, %arg2: memref<1x8x32xf32, #tpu.memory_space<vmem>>, %arg3: memref<1x8x32xf32, #tpu.memory_space<vmem>>, %arg4: memref<1x8x32xf32, #tpu.memory_space<vmem>>, %arg5: memref<1x8x32xf32, #tpu.memory_space<vmem>>, %arg6: memref<1x8x8xf32, #tpu.memory_space<vmem>>) attributes {dimension_semantics = [#tpu.dimension_semantics<parallel>, #tpu.dimension_semantics<parallel>], iteration_bounds = array<i64: 2, 1>, scalar_prefetch = 0 : i64, scratch_operands = 0 : i64, tpu.core_type = #tpu.core_type<tc>, window_params = [{transform_indices = @transform_0, window_bounds = array<i64: 1, 8, 32>}, {transform_indices = @transform_1, window_bounds = array<i64: 1, 8, 32>}, {transform_indices = @transform_2, window_bounds = array<i64: 1, 8, 32>}, {transform_indices = @transform_3, window_bounds = array<i64: 1, 8, 32>}, {transform_indices = @transform_4, window_bounds = array<i64: 1, 8, 8>}]} {
    %c0 = arith.constant 0 : index
    %c0_0 = arith.constant 0 : index
    %c0_1 = arith.constant 0 : index
    %0 = vector.load %arg2[%c0, %c0_0, %c0_1] : memref<1x8x32xf32, #tpu.memory_space<vmem>>, vector<1x8x32xf32>
    %1 = vector.shape_cast %0 : vector<1x8x32xf32> to vector<8x32xf32>
    %cst = arith.constant 0.176776692 : f32
    %2 = vector.broadcast %cst : f32 to vector<8x32xf32>
    %3 = arith.mulf %1, %2 : vector<8x32xf32>
    %c0_2 = arith.constant 0 : index
    %c0_3 = arith.constant 0 : index
    %c0_4 = arith.constant 0 : index
    %4 = vector.load %arg3[%c0_2, %c0_3, %c0_4] : memref<1x8x32xf32, #tpu.memory_space<vmem>>, vector<1x8x32xf32>
    %5 = vector.shape_cast %4 : vector<1x8x32xf32> to vector<8x32xf32>
    %c0_5 = arith.constant 0 : index
    %c0_6 = arith.constant 0 : index
    %c0_7 = arith.constant 0 : index
    %6 = vector.load %arg4[%c0_5, %c0_6, %c0_7] : memref<1x8x32xf32, #tpu.memory_space<vmem>>, vector<1x8x32xf32>
    %7 = vector.shape_cast %6 : vector<1x8x32xf32> to vector<8x32xf32>
    %8 = arith.truncf %3 : vector<8x32xf32> to vector<8x32xbf16>
    %9 = arith.truncf %5 : vector<8x32xf32> to vector<8x32xbf16>
    %cst_8 = arith.constant dense<0.000000e+00> : vector<8x8xf32>
    %10 = tpu.matmul %8, %9, %cst_8 {dimension_numbers = #tpu.dot_dimension_numbers<[1], [1], [0], [0], [0, 0, 1, 0], [], []>} : vector<8x32xbf16>, vector<8x32xbf16>, vector<8x8xf32> -> vector<8x8xf32>
    %cst_9 = arith.constant dense<0xFF800000> : vector<8xf32>
    %11 = vector.multi_reduction <maximumf>, %10, %cst_9 [1] : vector<8x8xf32> to vector<8xf32>
    %12 = vector.shape_cast %11 : vector<8xf32> to vector<8x1xf32>
    %13 = vector.broadcast %12 : vector<8x1xf32> to vector<8x8xf32>
    %14 = arith.subf %10, %13 : vector<8x8xf32>
    %15 = math.exp %14 : vector<8x8xf32>
    %cst_10 = arith.constant dense<0.000000e+00> : vector<8xf32>
    %16 = vector.multi_reduction <add>, %15, %cst_10 [1] : vector<8x8xf32> to vector<8xf32>
    %17 = vector.shape_cast %16 : vector<8xf32> to vector<8x1xf32>
    %18 = vector.broadcast %17 : vector<8x1xf32> to vector<8x8xf32>
    %19 = arith.divf %15, %18 : vector<8x8xf32>
    %20 = arith.truncf %19 : vector<8x8xf32> to vector<8x8xbf16>
    %c0_11 = arith.constant 0 : index
    %c0_12 = arith.constant 0 : index
    %c0_13 = arith.constant 0 : index
    %21 = vector.load %arg6[%c0_11, %c0_12, %c0_13] : memref<1x8x8xf32, #tpu.memory_space<vmem>>, vector<1x8x8xf32>
    %22 = vector.shape_cast %21 : vector<1x8x8xf32> to vector<8x8xf32>
    %23 = vector.shape_cast %19 : vector<8x8xf32> to vector<1x8x8xf32>
    tpu.vector_store %arg6[%c0_11, %c0_12, %c0_13], %23 {strides = array<i32>} : memref<1x8x8xf32, #tpu.memory_space<vmem>>, vector<1x8x8xf32>,
    %24 = arith.truncf %7 : vector<8x32xf32> to vector<8x32xbf16>
    %cst_14 = arith.constant dense<0.000000e+00> : vector<8x32xf32>
    %25 = tpu.matmul %20, %24, %cst_14 {dimension_numbers = #tpu.dot_dimension_numbers<[1], [0], [0], [1], [0, 0, 1, 1], [], []>} : vector<8x8xbf16>, vector<8x32xbf16>, vector<8x32xf32> -> vector<8x32xf32>
    %c0_15 = arith.constant 0 : index
    %c0_16 = arith.constant 0 : index
    %c0_17 = arith.constant 0 : index
    %26 = vector.load %arg5[%c0_15, %c0_16, %c0_17] : memref<1x8x32xf32, #tpu.memory_space<vmem>>, vector<1x8x32xf32>
    %27 = vector.shape_cast %26 : vector<1x8x32xf32> to vector<8x32xf32>
    %28 = vector.shape_cast %25 : vector<8x32xf32> to vector<1x8x32xf32>
    tpu.vector_store %arg5[%c0_15, %c0_16, %c0_17], %28 {strides = array<i32>} : memref<1x8x32xf32, #tpu.memory_space<vmem>>, vector<1x8x32xf32>,
    return
  }
  func.func @transform_0(%arg0: i32, %arg1: i32) -> (i32, i32, i32) {
    %c0_i32 = arith.constant 0 : i32
    %c0_i32_0 = arith.constant 0 : i32
    return %arg0, %arg1, %c0_i32 : i32, i32, i32
  }
  func.func @transform_1(%arg0: i32, %arg1: i32) -> (i32, i32, i32) {
    %c0_i32 = arith.constant 0 : i32
    %c0_i32_0 = arith.constant 0 : i32
    %c0_i32_1 = arith.constant 0 : i32
    return %arg0, %c0_i32, %c0_i32_0 : i32, i32, i32
  }
  func.func @transform_2(%arg0: i32, %arg1: i32) -> (i32, i32, i32) {
    %c0_i32 = arith.constant 0 : i32
    %c0_i32_0 = arith.constant 0 : i32
    %c0_i32_1 = arith.constant 0 : i32
    return %arg0, %c0_i32, %c0_i32_0 : i32, i32, i32
  }
  func.func @transform_3(%arg0: i32, %arg1: i32) -> (i32, i32, i32) {
    %c0_i32 = arith.constant 0 : i32
    %c0_i32_0 = arith.constant 0 : i32
    return %arg0, %arg1, %c0_i32 : i32, i32, i32
  }
  func.func @transform_4(%arg0: i32, %arg1: i32) -> (i32, i32, i32) {
    %c0_i32 = arith.constant 0 : i32
    %c0_i32_0 = arith.constant 0 : i32
    return %arg0, %arg1, %c0_i32 : i32, i32, i32
  }
}

</mosaic_0001>

<llo_original>
// kernel: tpu_custom_call.1
$region0: #{tpu_custom_call.1}
  #allocation0 [shape = 'u32[]', space=smem, size = 0x4, offset = 0x4, fixed_abs, tag = 'smem constant byte address 0x4 - core index']
  #allocation1 [shape = 'u32[144,128]{1,0:T(1,128)}', space=vmem, size = 0x12000, scoped, tag = 'internal scratch']
  %s0 = inlined_call_operand.hbm [shape: f32[2,8,32], index: 0, kind: input, shape index: {}]
  %s1 = inlined_call_operand.hbm [shape: f32[2,8,32], index: 1, kind: input, shape index: {}]
  %s2 = inlined_call_operand.hbm [shape: f32[2,8,32], index: 2, kind: input, shape index: {}]
  %s3 = inlined_call_operand.hbm [shape: f32[2,8,32], index: 3, kind: output, shape index: {0}]
  %s4 = inlined_call_operand.hbm [shape: f32[2,8,8], index: 4, kind: output, shape index: {1}]
  %5 = xla_tuple %s3, %s4
  %s6 = sld [smem:[#allocation0]]
  $region65: #{tpu_custom_call.1} parent=0
    _
  %s8 = ssub.s32 1, %s6
  %s9 = scalar_select 0, %s8, %s6
  $region1: #{tpu_custom_call.1} parent=0
    #allocation2 [shape = 'u8[8192]{0}', space=vmem, size = 0x2000, scoped, tag = 'input window, operand 0']
    #allocation3 [shape = 's32[2]{0}', space=sflag, size = 0x8, scoped, tag = 'scoped memory for tpu_custom_call.1']
    #allocation4 [shape = 's32[2]{0}', space=sflag, size = 0x8, scoped, tag = 'scoped memory for tpu_custom_call.1']
    #allocation5 [shape = 'u8[4096]{0}', space=vmem, size = 0x1000, scoped, tag = 'input window, operand 1, single buffered']
    #allocation6 [shape = 's32[1]{0}', space=sflag, size = 0x4, scoped, tag = 'scoped memory for tpu_custom_call.1']
    #allocation7 [shape = 'u8[4096]{0}', space=vmem, size = 0x1000, scoped, tag = 'input window, operand 2, single buffered']
    #allocation8 [shape = 'u8[8192]{0}', space=vmem, size = 0x2000, scoped, tag = 'output window, operand 0']
    #allocation9 [shape = 'u8[8192]{0}', space=vmem, size = 0x2000, scoped, tag = 'output window, operand 1']
    #allocation10 [shape = 's32[2]{0}', space=sflag, size = 0x8, scoped, tag = 'scoped memory for tpu_custom_call.1']
    %10 = vsyncpa [#allocation3], 0
    %s11 = scalar_lea.sflag [#allocation3], 1
    %12 = vsyncpa %s11, 0
    %13 = vsyncpa [#allocation6], 0
    %14 = vsyncpa [#allocation4], 0
    %s15 = scalar_lea.sflag [#allocation4], 1
    %16 = vsyncpa %s15, 0
    %17 = vsyncpa [#allocation10], 0
    %s18 = scalar_lea.sflag [#allocation10], 1
    %19 = vsyncpa %s18, 0
    loop: start=0, step=1, limit=4
    $region2: #{tpu_custom_call.1} parent=1 // loop_pre_header
      _
    $region3: #{tpu_custom_call.1} parent=1 // loop_header
      %s21 = sphi 0, %s25
      %p22 = scmp.ge.s32.totalorder %s21, 4
      %s28 = sphi 0, %s40
      %s29 = sphi 0, %s36
      %s30 = sphi 0, %s28
      %s31 = sphi 0, %s29
      %s32 = sphi 0, %s30
      %s33 = sphi 0, %s31
      %s45 = sphi 0, %s47
      %s48 = sphi 0, %s45
      %s49 = sphi 0, %s48
      %s65 = sphi 0, %s49
      %s71 = sphi 0, %s73
      %s74 = sphi 0, %s71
      %s75 = sphi 0, %s74
      %s91 = sphi 0, %s75
      %s97 = sphi 0, %s99
      %s100 = sphi 0, %s97
      %s101 = sphi 0, %s100
      %s117 = sphi 0, %s101
      %s125 = sphi 0, %s127
      %s128 = sphi 0, %s125
      %s129 = sphi 0, %s128
      %s145 = sphi 0, %s129
      %s153 = sphi 0, %s155
      %s156 = sphi 0, %s153
      %s157 = sphi 0, %s156
      %s173 = sphi 0, %s157
    $region4: #{tpu_custom_call.1} parent=1 // loop_header_branch
      %24 = sbr.rel (%p22) target = $region8
    $region5: #{tpu_custom_call.1} parent=1 // loop_body
      %s26 = ssub.s32 %s21, 1
      %s27 = ssub.s32 %s21, 2
      %s34 = sadd.s32 1, %s29
      %p35 = scmp.ge.s32.totalorder %s34, 1
      %s36 = scalar_select %p35, 0, %s34
      %s37 = sadd.s32 1, %s28
      %s38 = scalar_select %p35, %s37, %s28
      %p39 = scmp.ge.s32.totalorder %s38, 2
      %s40 = scalar_select %p39, 0, %s38
      %s41 = ssub.s32 %s28, %s40
      %s42 = ssub.s32 %s29, %s36
      %s43 = sor.u32 %s41, %s42
      %p44 = scmp.eq.s32.totalorder %s43, 0
      %s46 = sadd.s32 %s45, 1
      %s47 = scalar_select %p44, %s45, %s46
      %p50 = pneg %p44
      %p51 = scmp.eq.s32.totalorder %s21, 1
      %p52 = por %p50, %p51
      %p53 = scmp.ne.s32.totalorder %s45, %s48
      %p54 = scmp.eq.s32.totalorder %s21, 0
      %p55 = por %p53, %p54
      %p56 = scmp.ne.s32.totalorder %s45, %s48
      %p57 = scmp.eq.s32.totalorder %s26, 1
      %p58 = por %p56, %p57
      %p59 = scmp.ne.s32.totalorder %s48, %s49
      %p60 = scmp.eq.s32.totalorder %s26, 0
      %p61 = por %p59, %p60
      %p62 = scmp.ne.s32.totalorder %s48, %s49
      %p63 = scmp.eq.s32.totalorder %s27, 1
      %p64 = por %p62, %p63
      %p66 = scmp.ne.s32.totalorder %s49, %s65
      %p67 = scmp.eq.s32.totalorder %s27, 0
      %p68 = por %p66, %p67
      %s69 = ssub.s32 %s28, %s40
      %p70 = scmp.eq.s32.totalorder %s69, 0
      %s72 = sadd.s32 %s71, 1
      %s73 = scalar_select %p70, %s71, %s72
      %p76 = pneg %p70
      %p77 = scmp.eq.s32.totalorder %s21, 1
      %p78 = por %p76, %p77
      %p79 = scmp.ne.s32.totalorder %s71, %s74
      %p80 = scmp.eq.s32.totalorder %s21, 0
      %p81 = por %p79, %p80
      %p82 = scmp.ne.s32.totalorder %s71, %s74
      %p83 = scmp.eq.s32.totalorder %s26, 1
      %p84 = por %p82, %p83
      %p85 = scmp.ne.s32.totalorder %s74, %s75
      %p86 = scmp.eq.s32.totalorder %s26, 0
      %p87 = por %p85, %p86
      %p88 = scmp.ne.s32.totalorder %s74, %s75
      %p89 = scmp.eq.s32.totalorder %s27, 1
      %p90 = por %p88, %p89
      %p92 = scmp.ne.s32.totalorder %s75, %s91
      %p93 = scmp.eq.s32.totalorder %s27, 0
      %p94 = por %p92, %p93
      %s95 = ssub.s32 %s28, %s40
      %p96 = scmp.eq.s32.totalorder %s95, 0
      %s98 = sadd.s32 %s97, 1
      %s99 = scalar_select %p96, %s97, %s98
      %p102 = pneg %p96
      %p103 = scmp.eq.s32.totalorder %s21, 1
      %p104 = por %p102, %p103
      %p105 = scmp.ne.s32.totalorder %s97, %s100
      %p106 = scmp.eq.s32.totalorder %s21, 0
      %p107 = por %p105, %p106
      %p108 = scmp.ne.s32.totalorder %s97, %s100
      %p109 = scmp.eq.s32.totalorder %s26, 1
      %p110 = por %p108, %p109
      %p111 = scmp.ne.s32.totalorder %s100, %s101
      %p112 = scmp.eq.s32.totalorder %s26, 0
      %p113 = por %p111, %p112
      %p114 = scmp.ne.s32.totalorder %s100, %s101
      %p115 = scmp.eq.s32.totalorder %s27, 1
      %p116 = por %p114, %p115
      %p118 = scmp.ne.s32.totalorder %s101, %s117
      %p119 = scmp.eq.s32.totalorder %s27, 0
      %p120 = por %p118, %p119
      %s121 = ssub.s32 %s28, %s40
      %s122 = ssub.s32 %s29, %s36
      %s123 = sor.u32 %s121, %s122
      %p124 = scmp.eq.s32.totalorder %s123, 0
      %s126 = sadd.s32 %s125, 1
      %s127 = scalar_select %p124, %s125, %s126
      %p130 = pneg %p124
      %p131 = scmp.eq.s32.totalorder %s21, 1
      %p132 = por %p130, %p131
      %p133 = scmp.ne.s32.totalorder %s125, %s128
      %p134 = scmp.eq.s32.totalorder %s21, 0
      %p135 = por %p133, %p134
      %p136 = scmp.ne.s32.totalorder %s125, %s128
      %p137 = scmp.eq.s32.totalorder %s26, 1
      %p138 = por %p136, %p137
      %p139 = scmp.ne.s32.totalorder %s128, %s129
      %p140 = scmp.eq.s32.totalorder %s26, 0
      %p141 = por %p139, %p140
      %p142 = scmp.ne.s32.totalorder %s128, %s129
      %p143 = scmp.eq.s32.totalorder %s27, 1
      %p144 = por %p142, %p143
      %p146 = scmp.ne.s32.totalorder %s129, %s145
      %p147 = scmp.eq.s32.totalorder %s27, 0
      %p148 = por %p146, %p147
      %s149 = ssub.s32 %s28, %s40
      %s150 = ssub.s32 %s29, %s36
      %s151 = sor.u32 %s149, %s150
      %p152 = scmp.eq.s32.totalorder %s151, 0
      %s154 = sadd.s32 %s153, 1
      %s155 = scalar_select %p152, %s153, %s154
      %p158 = pneg %p152
      %p159 = scmp.eq.s32.totalorder %s21, 1
      %p160 = por %p158, %p159
      %p161 = scmp.ne.s32.totalorder %s153, %s156
      %p162 = scmp.eq.s32.totalorder %s21, 0
      %p163 = por %p161, %p162
      %p164 = scmp.ne.s32.totalorder %s153, %s156
      %p165 = scmp.eq.s32.totalorder %s26, 1
      %p166 = por %p164, %p165
      %p167 = scmp.ne.s32.totalorder %s156, %s157
      %p168 = scmp.eq.s32.totalorder %s26, 0
      %p169 = por %p167, %p168
      %p170 = scmp.ne.s32.totalorder %s156, %s157
      %p171 = scmp.eq.s32.totalorder %s27, 1
      %p172 = por %p170, %p171
      %p174 = scmp.ne.s32.totalorder %s157, %s173
      %p175 = scmp.eq.s32.totalorder %s27, 0
      %p176 = por %p174, %p175
      %p177 = scmp.le.s32.totalorder 1, %s21
      %p178 = scmp.lt.s32.totalorder %s21, 3
      %p179 = pnand %p177, %p178
      %p180 = pneg %p179
      // Predicated region
      $region9: #{tpu_custom_call.1} parent=5 // pred_check
        _
      $region10: #{tpu_custom_call.1} parent=5 // pred_check_branch
        %182 = sbr.rel (%p179) target = $region12
      $region11: #{tpu_custom_call.1} parent=5 // pred_region
        %s183 = ssub.s32 %s21, 1
        // Predicated region
        $region13: #{tpu_custom_call.1} parent=11 // pred_check
          %p184 = pneg %p87
        $region14: #{tpu_custom_call.1} parent=11 // pred_check_branch
          %186 = sbr.rel (%p184) target = $region16
        $region15: #{tpu_custom_call.1} parent=11 // pred_region
          %s188 = ssub.s32 128, 128
          %189 = vsyncadd [#allocation6], %s188
          %s190 = smul.addr %s30, 128
          %s191 = scalar_lea.hbm %s1, %s190
          %s193 = sshll.u32 [#allocation5], 4
          %s194 = int_to_ptr.vmem [resolvable:$true] %s193
          %196 = dma.hbm_to_vmem [thread:$0]  %s191, 128, %s194, [#allocation6]
        $region16: #{tpu_custom_call.1} parent=11 // pred_fallthru
          _
        // Predicated region
        $region17: #{tpu_custom_call.1} parent=11 // pred_check
          %p197 = pneg %p113
        $region18: #{tpu_custom_call.1} parent=11 // pred_check_branch
          %199 = sbr.rel (%p197) target = $region20
        $region19: #{tpu_custom_call.1} parent=11 // pred_region
          %s201 = ssub.s32 128, 128
          %202 = vsyncadd [#allocation6], %s201
          %s203 = smul.addr %s30, 128
          %s204 = scalar_lea.hbm %s2, %s203
          %s206 = sshll.u32 [#allocation7], 4
          %s207 = int_to_ptr.vmem [resolvable:$true] %s206
          %209 = dma.hbm_to_vmem [thread:$0]  %s204, 128, %s207, [#allocation6]
        $region20: #{tpu_custom_call.1} parent=11 // pred_fallthru
          _
      $region12: #{tpu_custom_call.1} parent=5 // pred_fallthru
        _
      %p210 = scmp.lt.s32.totalorder %s21, 2
      // Predicated region
      $region21: #{tpu_custom_call.1} parent=5 // pred_check
        %p211 = pneg %p210
      $region22: #{tpu_custom_call.1} parent=5 // pred_check_branch
        %213 = sbr.rel (%p211) target = $region24
      $region23: #{tpu_custom_call.1} parent=5 // pred_region
        // Predicated region
        $region25: #{tpu_custom_call.1} parent=23 // pred_check
          %p214 = pneg %p55
        $region26: #{tpu_custom_call.1} parent=23 // pred_check_branch
          %216 = sbr.rel (%p214) target = $region28
        $region27: #{tpu_custom_call.1} parent=23 // pred_region
          %s217 = sand.u32 %s45, 1
          %s218 = scalar_lea.sflag [#allocation3], %s217
          %s219 = sand.u32 %s45, 1
          %s220 = smul.addr %s219, 8
          %s221 = scalar_lea.vmem [#allocation2], %s220
          %s223 = ssub.s32 128, 128
          %224 = vsyncadd %s218, %s223
          %s225 = sadd.s32 %s29, %s28
          %s226 = smul.addr %s225, 128
          %s227 = scalar_lea.hbm %s0, %s226
          %s229 = sshll.u32 %s221, 4
          %s230 = int_to_ptr.vmem [resolvable:$true] %s229
          %232 = dma.hbm_to_vmem [thread:$0]  %s227, 128, %s230, %s218
        $region28: #{tpu_custom_call.1} parent=23 // pred_fallthru
          _
      $region24: #{tpu_custom_call.1} parent=5 // pred_fallthru
        _
      %p233 = scmp.le.s32.totalorder 1, %s21
      %p234 = scmp.lt.s32.totalorder %s21, 3
      %p235 = pnand %p233, %p234
      %p236 = pneg %p235
      // Predicated region
      $region29: #{tpu_custom_call.1} parent=5 // pred_check
        _
      $region30: #{tpu_custom_call.1} parent=5 // pred_check_branch
        %238 = sbr.rel (%p235) target = $region32
      $region31: #{tpu_custom_call.1} parent=5 // pred_region
        %s239 = ssub.s32 %s21, 1
        %s240 = sand.u32 %s48, 1
        %s241 = scalar_lea.sflag [#allocation3], %s240
        %s242 = sand.u32 %s48, 1
        %s243 = smul.addr %s242, 8
        %s244 = scalar_lea.vmem [#allocation2], %s243
        // Predicated region
        $region33: #{tpu_custom_call.1} parent=31 // pred_check
          %p245 = pneg %p61
        $region34: #{tpu_custom_call.1} parent=31 // pred_check_branch
          %247 = sbr.rel (%p245) target = $region36
        $region35: #{tpu_custom_call.1} parent=31 // pred_region
          %248 = dma.done %s241, 128
        $region36: #{tpu_custom_call.1} parent=31 // pred_fallthru
          _
        // Predicated region
        $region37: #{tpu_custom_call.1} parent=31 // pred_check
          %p249 = pneg %p87
        $region38: #{tpu_custom_call.1} parent=31 // pred_check_branch
          %251 = sbr.rel (%p249) target = $region40
        $region39: #{tpu_custom_call.1} parent=31 // pred_region
          %252 = dma.done [#allocation6], 128
        $region40: #{tpu_custom_call.1} parent=31 // pred_fallthru
          _
        // Predicated region
        $region41: #{tpu_custom_call.1} parent=31 // pred_check
          %p253 = pneg %p113
        $region42: #{tpu_custom_call.1} parent=31 // pred_check_branch
          %255 = sbr.rel (%p253) target = $region44
        $region43: #{tpu_custom_call.1} parent=31 // pred_region
          %256 = dma.done [#allocation6], 128
        $region44: #{tpu_custom_call.1} parent=31 // pred_fallthru
          _
        %s257 = sand.u32 %s48, 1
        %s258 = scalar_lea.sflag [#allocation3], %s257
        %s259 = sand.u32 %s48, 1
        %s260 = smul.addr %s259, 8
        %s261 = scalar_lea.vmem [#allocation2], %s260
        %p262 = pneg %p61
        %p263 = pneg %p58
        %p264 = pneg %p87
        %p265 = pneg %p84
        %p266 = pneg %p113
        %p267 = pneg %p110
        %p268 = pneg %p141
        %p269 = pneg %p138
        %s270 = sand.u32 %s128, 1
        %s271 = scalar_lea.sflag [#allocation4], %s270
        %s272 = sand.u32 %s128, 1
        %s273 = smul.addr %s272, 8
        %s274 = scalar_lea.vmem [#allocation8], %s273
        %p275 = pneg %p169
        %p276 = pneg %p166
        %s277 = sand.u32 %s156, 1
        %s278 = scalar_lea.sflag [#allocation10], %s277
        %s279 = sand.u32 %s156, 1
        %s280 = smul.addr %s279, 8
        %s281 = scalar_lea.vmem [#allocation9], %s280
        %v283 = vld [vmem:[%s244] sm:$0xff]
        %v284 = vmul.f32 %v283, 0.17677669
        %v285 = vld [vmem:[#allocation5] sm:$0xff]
        %v286 = vld [vmem:[#allocation7] sm:$0xff]
        %v287 = vpack.c.bf16 %v284, %v284
        %v288 = vpack.c.bf16 %v285, %v285
        %vm289 = vcmask 261120
        %v291 = vsel %vm289, %v287, 0
        %v294 = vsel %vm289, %v288, 0
        %296 = vmatprep.subr.bf16.mxu0 0
        %297 = vmatpush1.bf16.xpose.msra.mxu0 %v294
        %298 = vmatprep.subr.bf16.mxu0 0
        %299 = vmatpush1.bf16.xpose.msra.mxu0 0
        %300 = vmatprep.subr.bf16.mxu0 0
        %301 = vmatpush1.bf16.xpose.msra.mxu0 0
        %302 = vmatprep.subr.bf16.mxu0 0
        %303 = vmatpush1.bf16.xpose.msra.mxu0 0
        %304 = vmatprep.subr.bf16.mxu0 0
        %305 = vmatpush1.bf16.xpose.msra.mxu0 0
        %306 = vmatprep.subr.bf16.mxu0 0
        %307 = vmatpush1.bf16.xpose.msra.mxu0 0
        %308 = vmatprep.subr.bf16.mxu0 0
        %309 = vmatpush1.bf16.xpose.msra.mxu0 0
        %310 = vmatprep.subr.bf16.mxu0 0
        %311 = vmatpush1.bf16.xpose.msra.mxu0 0
        %312 = vmatprep.subr.bf16.mxu0 0
        %313 = vmatpush1.bf16.xpose.msra.mxu0 0
        %314 = vmatprep.subr.bf16.mxu0 0
        %315 = vmatpush1.bf16.xpose.msra.mxu0 0
        %316 = vmatprep.subr.bf16.mxu0 0
        %317 = vmatpush1.bf16.xpose.msra.mxu0 0
        %318 = vmatprep.subr.bf16.mxu0 0
        %319 = vmatpush1.bf16.xpose.msra.mxu0 0
        %320 = vmatprep.subr.bf16.mxu0 0
        %321 = vmatpush1.bf16.xpose.msra.mxu0 0
        %322 = vmatprep.subr.bf16.mxu0 0
        %323 = vmatpush1.bf16.xpose.msra.mxu0 0
        %324 = vmatprep.subr.bf16.mxu0 0
        %325 = vmatpush1.bf16.xpose.msra.mxu0 0
        %326 = vmatprep.subr.bf16.mxu0 0
        %327 = vmatpush1.bf16.xpose.msra.mxu0 0
        %328 = vmatprep.mubr.bf16.mxu0 0
        %329 = vmatmul.mubr.bf16.gmra.mrb[0].mxu0 %v291
        %v330 = vpop.f32.mrb[0].mxu0
        %v331 = vadd.f32 0.0, %v330
        %v332 = vpop.f32.mrb[0].mxu0
        %v333 = vpop.f32.mrb[0].mxu0
        %v334 = vpop.f32.mrb[0].mxu0
        %335 = vdwg.mxu0
        %vm336 = vcmask 64512
        %v337 = vsel %vm336, %v331, -inf
        %338 = vmax.xlane.f32.xlu0 %v337
        %v339 = vpop.xlane.xlu0 %338
        %v340 = vsub.f32 %v331, %v339
        %v341 = vmul.f32 %v340, 1.442695
        %v342 = vpow.pop %v341
        %v343 = vsel %vm336, %v342, 0.0
        %344 = vadd.xlane.f32.xlu0 %v343
        %v345 = vpop.xlane.xlu0 %344
        %v346 = vrcp.pop %v345
        %v347 = vmul.f32 %v342, %v346
        %v348 = vpack.c.bf16 %v347, %v347
        %349 = vst.msk [vmem:[%s281] sm:$0xff] %vm336, %v347
        %v350 = vpack.c.bf16 %v286, %v286
        %v352 = vsel %vm336, %v348, 0
        %vm354 = vcmask 1043456
        %v356 = vsel %vm354, %v350, 0
        %358 = vmatprep.subr.bf16.mxu0 0
        %359 = vmatpush1.bf16.msra.mxu0 %v356
        %360 = vmatprep.subr.bf16.mxu0 0
        %361 = vmatpush1.bf16.msra.mxu0 0
        %362 = vmatprep.subr.bf16.mxu0 0
        %363 = vmatpush1.bf16.msra.mxu0 0
        %364 = vmatprep.subr.bf16.mxu0 0
        %365 = vmatpush1.bf16.msra.mxu0 0
        %366 = vmatprep.subr.bf16.mxu0 0
        %367 = vmatpush1.bf16.msra.mxu0 0
        %368 = vmatprep.subr.bf16.mxu0 0
        %369 = vmatpush1.bf16.msra.mxu0 0
        %370 = vmatprep.subr.bf16.mxu0 0
        %371 = vmatpush1.bf16.msra.mxu0 0
        %372 = vmatprep.subr.bf16.mxu0 0
        %373 = vmatpush1.bf16.msra.mxu0 0
        %374 = vmatprep.subr.bf16.mxu0 0
        %375 = vmatpush1.bf16.msra.mxu0 0
        %376 = vmatprep.subr.bf16.mxu0 0
        %377 = vmatpush1.bf16.msra.mxu0 0
        %378 = vmatprep.subr.bf16.mxu0 0
        %379 = vmatpush1.bf16.msra.mxu0 0
        %380 = vmatprep.subr.bf16.mxu0 0
        %381 = vmatpush1.bf16.msra.mxu0 0
        %382 = vmatprep.subr.bf16.mxu0 0
        %383 = vmatpush1.bf16.msra.mxu0 0
        %384 = vmatprep.subr.bf16.mxu0 0
        %385 = vmatpush1.bf16.msra.mxu0 0
        %386 = vmatprep.subr.bf16.mxu0 0
        %387 = vmatpush1.bf16.msra.mxu0 0
        %388 = vmatprep.subr.bf16.mxu0 0
        %389 = vmatpush1.bf16.msra.mxu0 0
        %390 = vmatprep.mubr.bf16.mxu0 0
        %391 = vmatmul.mubr.bf16.gmra.mrb[0].mxu0 %v352
        %v392 = vpop.f32.mrb[0].mxu0
        %v393 = vadd.f32 0.0, %v392
        %v394 = vpop.f32.mrb[0].mxu0
        %v395 = vpop.f32.mrb[0].mxu0
        %v396 = vpop.f32.mrb[0].mxu0
        %397 = vdwg.mxu0
        %398 = vst.msk [vmem:[%s274] sm:$0xff] %vm289, %v393
        %s399 = sand.u32 %s128, 1
        %s400 = scalar_lea.sflag [#allocation4], %s399
        %s401 = sand.u32 %s128, 1
        %s402 = smul.addr %s401, 8
        %s403 = scalar_lea.vmem [#allocation8], %s402
        %s404 = sand.u32 %s156, 1
        %s405 = scalar_lea.sflag [#allocation10], %s404
        %s406 = sand.u32 %s156, 1
        %s407 = smul.addr %s406, 8
        %s408 = scalar_lea.vmem [#allocation9], %s407
        // Predicated region
        $region45: #{tpu_custom_call.1} parent=31 // pred_check
          %p409 = pneg %p138
        $region46: #{tpu_custom_call.1} parent=31 // pred_check_branch
          %411 = sbr.rel (%p409) target = $region48
        $region47: #{tpu_custom_call.1} parent=31 // pred_region
          %s413 = ssub.s32 128, 128
          %414 = vsyncadd %s400, %s413
          %s415 = sadd.s32 %s31, %s30
          %s416 = smul.addr %s415, 128
          %s417 = scalar_lea.hbm %s3, %s416
          %s419 = sshll.u32 %s403, 4
          %s420 = int_to_ptr.vmem [resolvable:$true] %s419
          %422 = dma.vmem_to_hbm [thread:$0]  %s420, 128, %s417, %s400
        $region48: #{tpu_custom_call.1} parent=31 // pred_fallthru
          _
        // Predicated region
        $region49: #{tpu_custom_call.1} parent=31 // pred_check
          %p423 = pneg %p166
        $region50: #{tpu_custom_call.1} parent=31 // pred_check_branch
          %425 = sbr.rel (%p423) target = $region52
        $region51: #{tpu_custom_call.1} parent=31 // pred_region
          %s427 = ssub.s32 128, 128
          %428 = vsyncadd %s405, %s427
          %s429 = sadd.s32 %s31, %s30
          %s430 = smul.addr %s429, 128
          %s431 = scalar_lea.hbm %s4, %s430
          %s433 = sshll.u32 %s408, 4
          %s434 = int_to_ptr.vmem [resolvable:$true] %s433
          %436 = dma.vmem_to_hbm [thread:$0]  %s434, 128, %s431, %s405
        $region52: #{tpu_custom_call.1} parent=31 // pred_fallthru
          _
      $region32: #{tpu_custom_call.1} parent=5 // pred_fallthru
        _
      %p437 = scmp.le.s32.totalorder 2, %s21
      // Predicated region
      $region53: #{tpu_custom_call.1} parent=5 // pred_check
        %p438 = pneg %p437
      $region54: #{tpu_custom_call.1} parent=5 // pred_check_branch
        %440 = sbr.rel (%p438) target = $region56
      $region55: #{tpu_custom_call.1} parent=5 // pred_region
        %s441 = ssub.s32 %s21, 2
        // Predicated region
        $region57: #{tpu_custom_call.1} parent=55 // pred_check
          %p442 = pneg %p144
        $region58: #{tpu_custom_call.1} parent=55 // pred_check_branch
          %444 = sbr.rel (%p442) target = $region60
        $region59: #{tpu_custom_call.1} parent=55 // pred_region
          %s445 = sand.u32 %s129, 1
          %s446 = scalar_lea.sflag [#allocation4], %s445
          %s447 = sand.u32 %s129, 1
          %s448 = smul.addr %s447, 8
          %s449 = scalar_lea.vmem [#allocation8], %s448
          %450 = dma.done %s446, 128
        $region60: #{tpu_custom_call.1} parent=55 // pred_fallthru
          _
        // Predicated region
        $region61: #{tpu_custom_call.1} parent=55 // pred_check
          %p451 = pneg %p172
        $region62: #{tpu_custom_call.1} parent=55 // pred_check_branch
          %453 = sbr.rel (%p451) target = $region64
        $region63: #{tpu_custom_call.1} parent=55 // pred_region
          %s454 = sand.u32 %s157, 1
          %s455 = scalar_lea.sflag [#allocation10], %s454
          %s456 = sand.u32 %s157, 1
          %s457 = smul.addr %s456, 8
          %s458 = scalar_lea.vmem [#allocation9], %s457
          %459 = dma.done %s455, 128
        $region64: #{tpu_custom_call.1} parent=55 // pred_fallthru
          _
      $region56: #{tpu_custom_call.1} parent=5 // pred_fallthru
        _
    $region6: #{tpu_custom_call.1} parent=1 // loop_footer
      %s25 = sadd.s32 1, %s21
    $region7: #{tpu_custom_call.1} parent=1 // loop_footer_branch
      %20 = sbr.rel target = $region3
    $region8: #{tpu_custom_call.1} parent=1 // loop_exit
      _
    %460 = vsyncpa [#allocation3], 1
    %s461 = scalar_lea.sflag [#allocation3], 1
    %462 = vsyncpa %s461, 1
    %463 = vsyncpa [#allocation6], 1
    %464 = vsyncpa [#allocation4], 1
    %s465 = scalar_lea.sflag [#allocation4], 1
    %466 = vsyncpa %s465, 1
    %467 = vsyncpa [#allocation10], 1
    %s468 = scalar_lea.sflag [#allocation10], 1
    %469 = vsyncpa %s468, 1

// kernel: tpu_custom_call.1
$region0: #{tpu_custom_call.1}
  #allocation0 [shape = 'u32[]', space=smem, size = 0x4, offset = 0x4, fixed_abs, tag = 'smem constant byte address 0x4 - core index']
  #allocation1 [shape = 'u32[144,128]{1,0:T(1,128)}', space=vmem, size = 0x12000, scoped, tag = 'internal scratch']
  %s0 = inlined_call_operand.hbm [shape: f32[2,8,32], index: 0, kind: input, shape index: {}]
  %s1 = inlined_call_operand.hbm [shape: f32[2,8,32], index: 1, kind: input, shape index: {}]
  %s2 = inlined_call_operand.hbm [shape: f32[2,8,32], index: 2, kind: input, shape index: {}]
  %s3 = inlined_call_operand.hbm [shape: f32[2,8,32], index: 3, kind: output, shape index: {0}]
  %s4 = inlined_call_operand.hbm [shape: f32[2,8,8], index: 4, kind: output, shape index: {1}]
  %5 = xla_tuple %s3, %s4
  %s6 = sld [smem:[#allocation0]]
  $region65: #{tpu_custom_call.1} parent=0
    _
  %s8 = ssub.s32 1, %s6
  %s9 = scalar_select 0, %s8, %s6
  $region1: #{tpu_custom_call.1} parent=0
    #allocation2 [shape = 'u8[8192]{0}', space=vmem, size = 0x2000, scoped, tag = 'input window, operand 0']
    #allocation3 [shape = 's32[2]{0}', space=sflag, size = 0x8, scoped, tag = 'scoped memory for tpu_custom_call.1']
    #allocation4 [shape = 's32[2]{0}', space=sflag, size = 0x8, scoped, tag = 'scoped memory for tpu_custom_call.1']
    #allocation5 [shape = 'u8[8192]{0}', space=vmem, size = 0x2000, scoped, tag = 'input window, operand 1']
    #allocation6 [shape = 's32[2]{0}', space=sflag, size = 0x8, scoped, tag = 'scoped memory for tpu_custom_call.1']
    #allocation7 [shape = 'u8[8192]{0}', space=vmem, size = 0x2000, scoped, tag = 'input window, operand 2']
    #allocation8 [shape = 'u8[8192]{0}', space=vmem, size = 0x2000, scoped, tag = 'output window, operand 0']
    #allocation9 [shape = 'u8[8192]{0}', space=vmem, size = 0x2000, scoped, tag = 'output window, operand 1']
    #allocation10 [shape = 's32[2]{0}', space=sflag, size = 0x8, scoped, tag = 'scoped memory for tpu_custom_call.1']
    %10 = vsyncpa [#allocation3], 0
    %s11 = scalar_lea.sflag [#allocation3], 1
    %12 = vsyncpa %s11, 0
    %13 = vsyncpa [#allocation6], 0
    %s14 = scalar_lea.sflag [#allocation6], 1
    %15 = vsyncpa %s14, 0
    %16 = vsyncpa [#allocation4], 0
    %s17 = scalar_lea.sflag [#allocation4], 1
    %18 = vsyncpa %s17, 0
    %19 = vsyncpa [#allocation10], 0
    %s20 = scalar_lea.sflag [#allocation10], 1
    %21 = vsyncpa %s20, 0
    loop: start=0, step=1, limit=4
    $region2: #{tpu_custom_call.1} parent=1 // loop_pre_header
      _
    $region3: #{tpu_custom_call.1} parent=1 // loop_header
      %s23 = sphi 0, %s27
      %p24 = scmp.ge.s32.totalorder %s23, 4
      %s30 = sphi 0, %s42
      %s31 = sphi 0, %s38
      %s32 = sphi 0, %s30
      %s33 = sphi 0, %s31
      %s34 = sphi 0, %s32
      %s35 = sphi 0, %s33
      %s47 = sphi 0, %s49
      %s50 = sphi 0, %s47
      %s51 = sphi 0, %s50
      %s67 = sphi 0, %s51
      %s73 = sphi 0, %s75
      %s76 = sphi 0, %s73
      %s77 = sphi 0, %s76
      %s93 = sphi 0, %s77
      %s99 = sphi 0, %s101
      %s102 = sphi 0, %s99
      %s103 = sphi 0, %s102
      %s119 = sphi 0, %s103
      %s127 = sphi 0, %s129
      %s130 = sphi 0, %s127
      %s131 = sphi 0, %s130
      %s147 = sphi 0, %s131
      %s155 = sphi 0, %s157
      %s158 = sphi 0, %s155
      %s159 = sphi 0, %s158
      %s175 = sphi 0, %s159
    $region4: #{tpu_custom_call.1} parent=1 // loop_header_branch
      %26 = sbr.rel (%p24) target = $region8
    $region5: #{tpu_custom_call.1} parent=1 // loop_body
      %s28 = ssub.s32 %s23, 1
      %s29 = ssub.s32 %s23, 2
      %s36 = sadd.s32 1, %s31
      %p37 = scmp.ge.s32.totalorder %s36, 1
      %s38 = scalar_select %p37, 0, %s36
      %s39 = sadd.s32 1, %s30
      %s40 = scalar_select %p37, %s39, %s30
      %p41 = scmp.ge.s32.totalorder %s40, 2
      %s42 = scalar_select %p41, 0, %s40
      %s43 = ssub.s32 %s30, %s42
      %s44 = ssub.s32 %s31, %s38
      %s45 = sor.u32 %s43, %s44
      %p46 = scmp.eq.s32.totalorder %s45, 0
      %s48 = sadd.s32 %s47, 1
      %s49 = scalar_select %p46, %s47, %s48
      %p52 = pneg %p46
      %p53 = scmp.eq.s32.totalorder %s23, 1
      %p54 = por %p52, %p53
      %p55 = scmp.ne.s32.totalorder %s47, %s50
      %p56 = scmp.eq.s32.totalorder %s23, 0
      %p57 = por %p55, %p56
      %p58 = scmp.ne.s32.totalorder %s47, %s50
      %p59 = scmp.eq.s32.totalorder %s28, 1
      %p60 = por %p58, %p59
      %p61 = scmp.ne.s32.totalorder %s50, %s51
      %p62 = scmp.eq.s32.totalorder %s28, 0
      %p63 = por %p61, %p62
      %p64 = scmp.ne.s32.totalorder %s50, %s51
      %p65 = scmp.eq.s32.totalorder %s29, 1
      %p66 = por %p64, %p65
      %p68 = scmp.ne.s32.totalorder %s51, %s67
      %p69 = scmp.eq.s32.totalorder %s29, 0
      %p70 = por %p68, %p69
      %s71 = ssub.s32 %s30, %s42
      %p72 = scmp.eq.s32.totalorder %s71, 0
      %s74 = sadd.s32 %s73, 1
      %s75 = scalar_select %p72, %s73, %s74
      %p78 = pneg %p72
      %p79 = scmp.eq.s32.totalorder %s23, 1
      %p80 = por %p78, %p79
      %p81 = scmp.ne.s32.totalorder %s73, %s76
      %p82 = scmp.eq.s32.totalorder %s23, 0
      %p83 = por %p81, %p82
      %p84 = scmp.ne.s32.totalorder %s73, %s76
      %p85 = scmp.eq.s32.totalorder %s28, 1
      %p86 = por %p84, %p85
      %p87 = scmp.ne.s32.totalorder %s76, %s77
      %p88 = scmp.eq.s32.totalorder %s28, 0
      %p89 = por %p87, %p88
      %p90 = scmp.ne.s32.totalorder %s76, %s77
      %p91 = scmp.eq.s32.totalorder %s29, 1
      %p92 = por %p90, %p91
      %p94 = scmp.ne.s32.totalorder %s77, %s93
      %p95 = scmp.eq.s32.totalorder %s29, 0
      %p96 = por %p94, %p95
      %s97 = ssub.s32 %s30, %s42
      %p98 = scmp.eq.s32.totalorder %s97, 0
      %s100 = sadd.s32 %s99, 1
      %s101 = scalar_select %p98, %s99, %s100
      %p104 = pneg %p98
      %p105 = scmp.eq.s32.totalorder %s23, 1
      %p106 = por %p104, %p105
      %p107 = scmp.ne.s32.totalorder %s99, %s102
      %p108 = scmp.eq.s32.totalorder %s23, 0
      %p109 = por %p107, %p108
      %p110 = scmp.ne.s32.totalorder %s99, %s102
      %p111 = scmp.eq.s32.totalorder %s28, 1
      %p112 = por %p110, %p111
      %p113 = scmp.ne.s32.totalorder %s102, %s103
      %p114 = scmp.eq.s32.totalorder %s28, 0
      %p115 = por %p113, %p114
      %p116 = scmp.ne.s32.totalorder %s102, %s103
      %p117 = scmp.eq.s32.totalorder %s29, 1
      %p118 = por %p116, %p117
      %p120 = scmp.ne.s32.totalorder %s103, %s119
      %p121 = scmp.eq.s32.totalorder %s29, 0
      %p122 = por %p120, %p121
      %s123 = ssub.s32 %s30, %s42
      %s124 = ssub.s32 %s31, %s38
      %s125 = sor.u32 %s123, %s124
      %p126 = scmp.eq.s32.totalorder %s125, 0
      %s128 = sadd.s32 %s127, 1
      %s129 = scalar_select %p126, %s127, %s128
      %p132 = pneg %p126
      %p133 = scmp.eq.s32.totalorder %s23, 1
      %p134 = por %p132, %p133
      %p135 = scmp.ne.s32.totalorder %s127, %s130
      %p136 = scmp.eq.s32.totalorder %s23, 0
      %p137 = por %p135, %p136
      %p138 = scmp.ne.s32.totalorder %s127, %s130
      %p139 = scmp.eq.s32.totalorder %s28, 1
      %p140 = por %p138, %p139
      %p141 = scmp.ne.s32.totalorder %s130, %s131
      %p142 = scmp.eq.s32.totalorder %s28, 0
      %p143 = por %p141, %p142
      %p144 = scmp.ne.s32.totalorder %s130, %s131
      %p145 = scmp.eq.s32.totalorder %s29, 1
      %p146 = por %p144, %p145
      %p148 = scmp.ne.s32.totalorder %s131, %s147
      %p149 = scmp.eq.s32.totalorder %s29, 0
      %p150 = por %p148, %p149
      %s151 = ssub.s32 %s30, %s42
      %s152 = ssub.s32 %s31, %s38
      %s153 = sor.u32 %s151, %s152
      %p154 = scmp.eq.s32.totalorder %s153, 0
      %s156 = sadd.s32 %s155, 1
      %s157 = scalar_select %p154, %s155, %s156
      %p160 = pneg %p154
      %p161 = scmp.eq.s32.totalorder %s23, 1
      %p162 = por %p160, %p161
      %p163 = scmp.ne.s32.totalorder %s155, %s158
      %p164 = scmp.eq.s32.totalorder %s23, 0
      %p165 = por %p163, %p164
      %p166 = scmp.ne.s32.totalorder %s155, %s158
      %p167 = scmp.eq.s32.totalorder %s28, 1
      %p168 = por %p166, %p167
      %p169 = scmp.ne.s32.totalorder %s158, %s159
      %p170 = scmp.eq.s32.totalorder %s28, 0
      %p171 = por %p169, %p170
      %p172 = scmp.ne.s32.totalorder %s158, %s159
      %p173 = scmp.eq.s32.totalorder %s29, 1
      %p174 = por %p172, %p173
      %p176 = scmp.ne.s32.totalorder %s159, %s175
      %p177 = scmp.eq.s32.totalorder %s29, 0
      %p178 = por %p176, %p177
      %p179 = scmp.le.s32.totalorder 1, %s23
      %p180 = scmp.lt.s32.totalorder %s23, 3
      %p181 = pnand %p179, %p180
      %p182 = pneg %p181
      // Predicated region
      $region9: #{tpu_custom_call.1} parent=5 // pred_check
        _
      $region10: #{tpu_custom_call.1} parent=5 // pred_check_branch
        %184 = sbr.rel (%p181) target = $region12
      $region11: #{tpu_custom_call.1} parent=5 // pred_region
        %s185 = ssub.s32 %s23, 1
      $region12: #{tpu_custom_call.1} parent=5 // pred_fallthru
        _
      %p186 = scmp.lt.s32.totalorder %s23, 2
      // Predicated region
      $region13: #{tpu_custom_call.1} parent=5 // pred_check
        %p187 = pneg %p186
      $region14: #{tpu_custom_call.1} parent=5 // pred_check_branch
        %189 = sbr.rel (%p187) target = $region16
      $region15: #{tpu_custom_call.1} parent=5 // pred_region
        // Predicated region
        $region17: #{tpu_custom_call.1} parent=15 // pred_check
          %p190 = pneg %p57
        $region18: #{tpu_custom_call.1} parent=15 // pred_check_branch
          %192 = sbr.rel (%p190) target = $region20
        $region19: #{tpu_custom_call.1} parent=15 // pred_region
          %s193 = sand.u32 %s47, 1
          %s194 = scalar_lea.sflag [#allocation3], %s193
          %s195 = sand.u32 %s47, 1
          %s196 = smul.addr %s195, 8
          %s197 = scalar_lea.vmem [#allocation2], %s196
          %s199 = ssub.s32 128, 128
          %200 = vsyncadd %s194, %s199
          %s201 = sadd.s32 %s31, %s30
          %s202 = smul.addr %s201, 128
          %s203 = scalar_lea.hbm %s0, %s202
          %s205 = sshll.u32 %s197, 4
          %s206 = int_to_ptr.vmem [resolvable:$true] %s205
          %208 = dma.hbm_to_vmem [thread:$0]  %s203, 128, %s206, %s194
        $region20: #{tpu_custom_call.1} parent=15 // pred_fallthru
          _
        // Predicated region
        $region21: #{tpu_custom_call.1} parent=15 // pred_check
          %p209 = pneg %p83
        $region22: #{tpu_custom_call.1} parent=15 // pred_check_branch
          %211 = sbr.rel (%p209) target = $region24
        $region23: #{tpu_custom_call.1} parent=15 // pred_region
          %s212 = sand.u32 %s23, 1
          %s213 = scalar_lea.sflag [#allocation6], %s212
          %s214 = sand.u32 %s73, 1
          %s215 = smul.addr %s214, 8
          %s216 = scalar_lea.vmem [#allocation5], %s215
          %s218 = ssub.s32 128, 128
          %219 = vsyncadd %s213, %s218
          %s220 = smul.addr %s30, 128
          %s221 = scalar_lea.hbm %s1, %s220
          %s223 = sshll.u32 %s216, 4
          %s224 = int_to_ptr.vmem [resolvable:$true] %s223
          %226 = dma.hbm_to_vmem [thread:$0]  %s221, 128, %s224, %s213
        $region24: #{tpu_custom_call.1} parent=15 // pred_fallthru
          _
        // Predicated region
        $region25: #{tpu_custom_call.1} parent=15 // pred_check
          %p227 = pneg %p109
        $region26: #{tpu_custom_call.1} parent=15 // pred_check_branch
          %229 = sbr.rel (%p227) target = $region28
        $region27: #{tpu_custom_call.1} parent=15 // pred_region
          %s230 = sand.u32 %s23, 1
          %s231 = scalar_lea.sflag [#allocation6], %s230
          %s232 = sand.u32 %s99, 1
          %s233 = smul.addr %s232, 8
          %s234 = scalar_lea.vmem [#allocation7], %s233
          %s236 = ssub.s32 128, 128
          %237 = vsyncadd %s231, %s236
          %s238 = smul.addr %s30, 128
          %s239 = scalar_lea.hbm %s2, %s238
          %s241 = sshll.u32 %s234, 4
          %s242 = int_to_ptr.vmem [resolvable:$true] %s241
          %244 = dma.hbm_to_vmem [thread:$0]  %s239, 128, %s242, %s231
        $region28: #{tpu_custom_call.1} parent=15 // pred_fallthru
          _
      $region16: #{tpu_custom_call.1} parent=5 // pred_fallthru
        _
      %p245 = scmp.le.s32.totalorder 1, %s23
      %p246 = scmp.lt.s32.totalorder %s23, 3
      %p247 = pnand %p245, %p246
      %p248 = pneg %p247
      // Predicated region
      $region29: #{tpu_custom_call.1} parent=5 // pred_check
        _
      $region30: #{tpu_custom_call.1} parent=5 // pred_check_branch
        %250 = sbr.rel (%p247) target = $region32
      $region31: #{tpu_custom_call.1} parent=5 // pred_region
        %s251 = ssub.s32 %s23, 1
        %s252 = sand.u32 %s50, 1
        %s253 = scalar_lea.sflag [#allocation3], %s252
        %s254 = sand.u32 %s50, 1
        %s255 = smul.addr %s254, 8
        %s256 = scalar_lea.vmem [#allocation2], %s255
        // Predicated region
        $region33: #{tpu_custom_call.1} parent=31 // pred_check
          %p257 = pneg %p63
        $region34: #{tpu_custom_call.1} parent=31 // pred_check_branch
          %259 = sbr.rel (%p257) target = $region36
        $region35: #{tpu_custom_call.1} parent=31 // pred_region
          %260 = dma.done %s253, 128
        $region36: #{tpu_custom_call.1} parent=31 // pred_fallthru
          _
        %s261 = sand.u32 %s28, 1
        %s262 = scalar_lea.sflag [#allocation6], %s261
        %s263 = sand.u32 %s76, 1
        %s264 = smul.addr %s263, 8
        %s265 = scalar_lea.vmem [#allocation5], %s264
        // Predicated region
        $region37: #{tpu_custom_call.1} parent=31 // pred_check
          %p266 = pneg %p89
        $region38: #{tpu_custom_call.1} parent=31 // pred_check_branch
          %268 = sbr.rel (%p266) target = $region40
        $region39: #{tpu_custom_call.1} parent=31 // pred_region
          %269 = dma.done %s262, 128
        $region40: #{tpu_custom_call.1} parent=31 // pred_fallthru
          _
        %s270 = sand.u32 %s28, 1
        %s271 = scalar_lea.sflag [#allocation6], %s270
        %s272 = sand.u32 %s102, 1
        %s273 = smul.addr %s272, 8
        %s274 = scalar_lea.vmem [#allocation7], %s273
        // Predicated region
        $region41: #{tpu_custom_call.1} parent=31 // pred_check
          %p275 = pneg %p115
        $region42: #{tpu_custom_call.1} parent=31 // pred_check_branch
          %277 = sbr.rel (%p275) target = $region44
        $region43: #{tpu_custom_call.1} parent=31 // pred_region
          %278 = dma.done %s271, 128
        $region44: #{tpu_custom_call.1} parent=31 // pred_fallthru
          _
        %s279 = sand.u32 %s50, 1
        %s280 = scalar_lea.sflag [#allocation3], %s279
        %s281 = sand.u32 %s50, 1
        %s282 = smul.addr %s281, 8
        %s283 = scalar_lea.vmem [#allocation2], %s282
        %p284 = pneg %p63
        %p285 = pneg %p60
        %s286 = sand.u32 %s28, 1
        %s287 = scalar_lea.sflag [#allocation6], %s286
        %s288 = sand.u32 %s76, 1
        %s289 = smul.addr %s288, 8
        %s290 = scalar_lea.vmem [#allocation5], %s289
        %p291 = pneg %p89
        %p292 = pneg %p86
        %s293 = sand.u32 %s28, 1
        %s294 = scalar_lea.sflag [#allocation6], %s293
        %s295 = sand.u32 %s102, 1
        %s296 = smul.addr %s295, 8
        %s297 = scalar_lea.vmem [#allocation7], %s296
        %p298 = pneg %p115
        %p299 = pneg %p112
        %p300 = pneg %p143
        %p301 = pneg %p140
        %s302 = sand.u32 %s130, 1
        %s303 = scalar_lea.sflag [#allocation4], %s302
        %s304 = sand.u32 %s130, 1
        %s305 = smul.addr %s304, 8
        %s306 = scalar_lea.vmem [#allocation8], %s305
        %p307 = pneg %p171
        %p308 = pneg %p168
        %s309 = sand.u32 %s158, 1
        %s310 = scalar_lea.sflag [#allocation10], %s309
        %s311 = sand.u32 %s158, 1
        %s312 = smul.addr %s311, 8
        %s313 = scalar_lea.vmem [#allocation9], %s312
        %v315 = vld [vmem:[%s256] sm:$0xff]
        %v316 = vmul.f32 %v315, 0.17677669
        %v317 = vld [vmem:[%s265] sm:$0xff]
        %v318 = vld [vmem:[%s274] sm:$0xff]
        %v319 = vpack.c.bf16 %v316, %v316
        %v320 = vpack.c.bf16 %v317, %v317
        %vm321 = vcmask 261120
        %v323 = vsel %vm321, %v319, 0
        %v326 = vsel %vm321, %v320, 0
        %328 = vmatprep.subr.bf16.mxu0 0
        %329 = vmatpush1.bf16.xpose.msra.mxu0 %v326
        %330 = vmatprep.subr.bf16.mxu0 0
        %331 = vmatpush1.bf16.xpose.msra.mxu0 0
        %332 = vmatprep.subr.bf16.mxu0 0
        %333 = vmatpush1.bf16.xpose.msra.mxu0 0
        %334 = vmatprep.subr.bf16.mxu0 0
        %335 = vmatpush1.bf16.xpose.msra.mxu0 0
        %336 = vmatprep.subr.bf16.mxu0 0
        %337 = vmatpush1.bf16.xpose.msra.mxu0 0
        %338 = vmatprep.subr.bf16.mxu0 0
        %339 = vmatpush1.bf16.xpose.msra.mxu0 0
        %340 = vmatprep.subr.bf16.mxu0 0
        %341 = vmatpush1.bf16.xpose.msra.mxu0 0
        %342 = vmatprep.subr.bf16.mxu0 0
        %343 = vmatpush1.bf16.xpose.msra.mxu0 0
        %344 = vmatprep.subr.bf16.mxu0 0
        %345 = vmatpush1.bf16.xpose.msra.mxu0 0
        %346 = vmatprep.subr.bf16.mxu0 0
        %347 = vmatpush1.bf16.xpose.msra.mxu0 0
        %348 = vmatprep.subr.bf16.mxu0 0
        %349 = vmatpush1.bf16.xpose.msra.mxu0 0
        %350 = vmatprep.subr.bf16.mxu0 0
        %351 = vmatpush1.bf16.xpose.msra.mxu0 0
        %352 = vmatprep.subr.bf16.mxu0 0
        %353 = vmatpush1.bf16.xpose.msra.mxu0 0
        %354 = vmatprep.subr.bf16.mxu0 0
        %355 = vmatpush1.bf16.xpose.msra.mxu0 0
        %356 = vmatprep.subr.bf16.mxu0 0
        %357 = vmatpush1.bf16.xpose.msra.mxu0 0
        %358 = vmatprep.subr.bf16.mxu0 0
        %359 = vmatpush1.bf16.xpose.msra.mxu0 0
        %360 = vmatprep.mubr.bf16.mxu0 0
        %361 = vmatmul.mubr.bf16.gmra.mrb[0].mxu0 %v323
        %v362 = vpop.f32.mrb[0].mxu0
        %v363 = vadd.f32 0.0, %v362
        %v364 = vpop.f32.mrb[0].mxu0
        %v365 = vpop.f32.mrb[0].mxu0
        %v366 = vpop.f32.mrb[0].mxu0
        %367 = vdwg.mxu0
        %vm368 = vcmask 64512
        %v369 = vsel %vm368, %v363, -inf
        %370 = vmax.xlane.f32.xlu0 %v369
        %v371 = vpop.xlane.xlu0 %370
        %v372 = vsub.f32 %v363, %v371
        %v373 = vmul.f32 %v372, 1.442695
        %v374 = vpow.pop %v373
        %v375 = vsel %vm368, %v374, 0.0
        %376 = vadd.xlane.f32.xlu0 %v375
        %v377 = vpop.xlane.xlu0 %376
        %v378 = vrcp.pop %v377
        %v379 = vmul.f32 %v374, %v378
        %v380 = vpack.c.bf16 %v379, %v379
        %381 = vst.msk [vmem:[%s313] sm:$0xff] %vm368, %v379
        %v382 = vpack.c.bf16 %v318, %v318
        %v384 = vsel %vm368, %v380, 0
        %vm386 = vcmask 1043456
        %v388 = vsel %vm386, %v382, 0
        %390 = vmatprep.subr.bf16.mxu0 0
        %391 = vmatpush1.bf16.msra.mxu0 %v388
        %392 = vmatprep.subr.bf16.mxu0 0
        %393 = vmatpush1.bf16.msra.mxu0 0
        %394 = vmatprep.subr.bf16.mxu0 0
        %395 = vmatpush1.bf16.msra.mxu0 0
        %396 = vmatprep.subr.bf16.mxu0 0
        %397 = vmatpush1.bf16.msra.mxu0 0
        %398 = vmatprep.subr.bf16.mxu0 0
        %399 = vmatpush1.bf16.msra.mxu0 0
        %400 = vmatprep.subr.bf16.mxu0 0
        %401 = vmatpush1.bf16.msra.mxu0 0
        %402 = vmatprep.subr.bf16.mxu0 0
        %403 = vmatpush1.bf16.msra.mxu0 0
        %404 = vmatprep.subr.bf16.mxu0 0
        %405 = vmatpush1.bf16.msra.mxu0 0
        %406 = vmatprep.subr.bf16.mxu0 0
        %407 = vmatpush1.bf16.msra.mxu0 0
        %408 = vmatprep.subr.bf16.mxu0 0
        %409 = vmatpush1.bf16.msra.mxu0 0
        %410 = vmatprep.subr.bf16.mxu0 0
        %411 = vmatpush1.bf16.msra.mxu0 0
        %412 = vmatprep.subr.bf16.mxu0 0
        %413 = vmatpush1.bf16.msra.mxu0 0
        %414 = vmatprep.subr.bf16.mxu0 0
        %415 = vmatpush1.bf16.msra.mxu0 0
        %416 = vmatprep.subr.bf16.mxu0 0
        %417 = vmatpush1.bf16.msra.mxu0 0
        %418 = vmatprep.subr.bf16.mxu0 0
        %419 = vmatpush1.bf16.msra.mxu0 0
        %420 = vmatprep.subr.bf16.mxu0 0
        %421 = vmatpush1.bf16.msra.mxu0 0
        %422 = vmatprep.mubr.bf16.mxu0 0
        %423 = vmatmul.mubr.bf16.gmra.mrb[0].mxu0 %v384
        %v424 = vpop.f32.mrb[0].mxu0
        %v425 = vadd.f32 0.0, %v424
        %v426 = vpop.f32.mrb[0].mxu0
        %v427 = vpop.f32.mrb[0].mxu0
        %v428 = vpop.f32.mrb[0].mxu0
        %429 = vdwg.mxu0
        %430 = vst.msk [vmem:[%s306] sm:$0xff] %vm321, %v425
        %s431 = sand.u32 %s130, 1
        %s432 = scalar_lea.sflag [#allocation4], %s431
        %s433 = sand.u32 %s130, 1
        %s434 = smul.addr %s433, 8
        %s435 = scalar_lea.vmem [#allocation8], %s434
        %s436 = sand.u32 %s158, 1
        %s437 = scalar_lea.sflag [#allocation10], %s436
        %s438 = sand.u32 %s158, 1
        %s439 = smul.addr %s438, 8
        %s440 = scalar_lea.vmem [#allocation9], %s439
        // Predicated region
        $region45: #{tpu_custom_call.1} parent=31 // pred_check
          %p441 = pneg %p140
        $region46: #{tpu_custom_call.1} parent=31 // pred_check_branch
          %443 = sbr.rel (%p441) target = $region48
        $region47: #{tpu_custom_call.1} parent=31 // pred_region
          %s445 = ssub.s32 128, 128
          %446 = vsyncadd %s432, %s445
          %s447 = sadd.s32 %s33, %s32
          %s448 = smul.addr %s447, 128
          %s449 = scalar_lea.hbm %s3, %s448
          %s451 = sshll.u32 %s435, 4
          %s452 = int_to_ptr.vmem [resolvable:$true] %s451
          %454 = dma.vmem_to_hbm [thread:$0]  %s452, 128, %s449, %s432
        $region48: #{tpu_custom_call.1} parent=31 // pred_fallthru
          _
        // Predicated region
        $region49: #{tpu_custom_call.1} parent=31 // pred_check
          %p455 = pneg %p168
        $region50: #{tpu_custom_call.1} parent=31 // pred_check_branch
          %457 = sbr.rel (%p455) target = $region52
        $region51: #{tpu_custom_call.1} parent=31 // pred_region
          %s459 = ssub.s32 128, 128
          %460 = vsyncadd %s437, %s459
          %s461 = sadd.s32 %s33, %s32
          %s462 = smul.addr %s461, 128
          %s463 = scalar_lea.hbm %s4, %s462
          %s465 = sshll.u32 %s440, 4
          %s466 = int_to_ptr.vmem [resolvable:$true] %s465
          %468 = dma.vmem_to_hbm [thread:$0]  %s466, 128, %s463, %s437
        $region52: #{tpu_custom_call.1} parent=31 // pred_fallthru
          _
      $region32: #{tpu_custom_call.1} parent=5 // pred_fallthru
        _
      %p469 = scmp.le.s32.totalorder 2, %s23
      // Predicated region
      $region53: #{tpu_custom_call.1} parent=5 // pred_check
        %p470 = pneg %p469
      $region54: #{tpu_custom_call.1} parent=5 // pred_check_branch
        %472 = sbr.rel (%p470) target = $region56
      $region55: #{tpu_custom_call.1} parent=5 // pred_region
        %s473 = ssub.s32 %s23, 2
        // Predicated region
        $region57: #{tpu_custom_call.1} parent=55 // pred_check
          %p474 = pneg %p146
        $region58: #{tpu_custom_call.1} parent=55 // pred_check_branch
          %476 = sbr.rel (%p474) target = $region60
        $region59: #{tpu_custom_call.1} parent=55 // pred_region
          %s477 = sand.u32 %s131, 1
          %s478 = scalar_lea.sflag [#allocation4], %s477
          %s479 = sand.u32 %s131, 1
          %s480 = smul.addr %s479, 8
          %s481 = scalar_lea.vmem [#allocation8], %s480
          %482 = dma.done %s478, 128
        $region60: #{tpu_custom_call.1} parent=55 // pred_fallthru
          _
        // Predicated region
        $region61: #{tpu_custom_call.1} parent=55 // pred_check
          %p483 = pneg %p174
        $region62: #{tpu_custom_call.1} parent=55 // pred_check_branch
          %485 = sbr.rel (%p483) target = $region64
        $region63: #{tpu_custom_call.1} parent=55 // pred_region
          %s486 = sand.u32 %s159, 1
          %s487 = scalar_lea.sflag [#allocation10], %s486
          %s488 = sand.u32 %s159, 1
          %s489 = smul.addr %s488, 8
          %s490 = scalar_lea.vmem [#allocation9], %s489
          %491 = dma.done %s487, 128
        $region64: #{tpu_custom_call.1} parent=55 // pred_fallthru
          _
      $region56: #{tpu_custom_call.1} parent=5 // pred_fallthru
        _
    $region6: #{tpu_custom_call.1} parent=1 // loop_footer
      %s27 = sadd.s32 1, %s23
    $region7: #{tpu_custom_call.1} parent=1 // loop_footer_branch
      %22 = sbr.rel target = $region3
    $region8: #{tpu_custom_call.1} parent=1 // loop_exit
      _
    %492 = vsyncpa [#allocation3], 1
    %s493 = scalar_lea.sflag [#allocation3], 1
    %494 = vsyncpa %s493, 1
    %495 = vsyncpa [#allocation6], 1
    %s496 = scalar_lea.sflag [#allocation6], 1
    %497 = vsyncpa %s496, 1
    %498 = vsyncpa [#allocation4], 1
    %s499 = scalar_lea.sflag [#allocation4], 1
    %500 = vsyncpa %s499, 1
    %501 = vsyncpa [#allocation10], 1
    %s502 = scalar_lea.sflag [#allocation10], 1
    %503 = vsyncpa %s502, 1

</llo_original>
